<compile_context>
chip_gen: v7x
topology: tpu7x:2x2x1
jax: 0.10.0
libtpu: 0.0.40
codegen_flags: <defaults>
</compile_context>

<pallas_src>
import math
import functools

import numpy as np
import jax
import jax.numpy as jnp
from jax.experimental import pallas as pl
from jax.experimental.pallas import tpu as pltpu

SQRT2 = math.sqrt(2.0)
INV_SQRT2 = 1.0 / SQRT2
VMEM_SPEC = pl.BlockSpec(memory_space=pltpu.MemorySpace.VMEM)


def _round_up(x, m):
    return ((x + m - 1) // m) * m


# ------------------- fused matmul + bias + leaky_relu (+residual) -------------------

def _mm_kernel(*refs, act, has_res):
    if has_res:
        a_ref, w_ref, b_ref, r_ref, o_ref, acc_ref = refs
    else:
        a_ref, w_ref, b_ref, o_ref, acc_ref = refs
        r_ref = None
    kk = pl.program_id(2)

    @pl.when(kk == 0)
    def _():
        acc_ref[...] = jnp.zeros_like(acc_ref)

    acc_ref[...] += jnp.dot(a_ref[...], w_ref[...],
                            preferred_element_type=jnp.float32)

    @pl.when(kk == pl.num_programs(2) - 1)
    def _():
        r = acc_ref[...] + b_ref[...]                       # f32 epilogue
        if act:                                             # fused_leaky_relu
            r = jnp.where(r >= 0.0, r, 0.2 * r) * SQRT2
        if has_res:                                         # (out + skip)/sqrt(2)
            r = (r + r_ref[...]) * INV_SQRT2
        o_ref[...] = r.astype(o_ref.dtype)


def matmul_bias_act(a, w, b, act, residual=None, tm=256, tn=256, tk=512):
    """a:(M,K) x w:(K,N) + b -> (M,N); optional leaky_relu*sqrt2 and fused residual."""
    M, K = a.shape
    K2, N = w.shape
    assert K == K2
    tm = min(tm, _round_up(M, 8))
    tn = min(tn, _round_up(N, 128))
    tk = min(tk, _round_up(K, 128))
    Mp, Kp, Np = _round_up(M, tm), _round_up(K, tk), _round_up(N, tn)

    a_p = jnp.pad(a.astype(jnp.bfloat16), ((0, Mp - M), (0, Kp - K)))
    w_p = jnp.pad(w.astype(jnp.bfloat16), ((0, Kp - K), (0, Np - N)))
    b_p = jnp.pad(b.astype(jnp.float32), (0, Np - N)).reshape(1, Np)

    in_specs = [
        pl.BlockSpec((tm, tk), lambda i, j, k: (i, k)),
        pl.BlockSpec((tk, tn), lambda i, j, k: (k, j)),
        pl.BlockSpec((1, tn), lambda i, j, k: (0, j)),
    ]
    inputs = [a_p, w_p, b_p]
    has_res = residual is not None
    if has_res:
        r_p = jnp.pad(residual.astype(jnp.float32), ((0, Mp - M), (0, Np - N)))
        in_specs.append(pl.BlockSpec((tm, tn), lambda i, j, k: (i, j)))
        inputs.append(r_p)

    out = pl.pallas_call(
        functools.partial(_mm_kernel, act=act, has_res=has_res),
        out_shape=jax.ShapeDtypeStruct((Mp, Np), jnp.float32),
        grid_spec=pltpu.PrefetchScalarGridSpec(
            num_scalar_prefetch=0,
            grid=(Mp // tm, Np // tn, Kp // tk),
            in_specs=in_specs,
            out_specs=pl.BlockSpec((tm, tn), lambda i, j, k: (i, j)),
            scratch_shapes=[pltpu.VMEM((tm, tn), jnp.float32)]),
        compiler_params=pltpu.CompilerParams(
            dimension_semantics=("parallel", "parallel", "arbitrary"),
            vmem_limit_bytes=32 * 1024 * 1024),
    )(*inputs)
    return out[:M, :N]


# ------------------------ conv0: 1x1 conv, Cin=1 (VPU, no MXU) -----------------------

def _conv0_kernel(x_ref, w_ref, b_ref, o_ref):
    r = x_ref[...] * w_ref[...] + b_ref[...]        # (tm,1)*(1,C) broadcast
    o_ref[...] = (jnp.where(r >= 0.0, r, 0.2 * r) * SQRT2).astype(o_ref.dtype)


def conv0_1x1(x, w, scale, bias, tm=512):
    """x:(N,H,W,1) NHWC; w:(Cout,1,1,1). 1x1 conv + bias + fused_leaky_relu."""
    N, H, W, Cin = x.shape
    assert Cin == 1
    Cout = w.shape[0]
    M = N * H * W
    tm = min(tm, _round_up(M, 8))
    Mp = _round_up(M, tm)
    x2 = jnp.pad(x.reshape(M, 1).astype(jnp.float32), ((0, Mp - M), (0, 0)))
    wrow = (w.reshape(1, Cout) * scale).astype(jnp.float32)
    brow = bias.reshape(1, Cout).astype(jnp.float32)
    out = pl.pallas_call(
        _conv0_kernel,
        out_shape=jax.ShapeDtypeStruct((Mp, Cout), jnp.float32),
        grid=(Mp // tm,),
        in_specs=[pl.BlockSpec((tm, 1), lambda i: (i, 0)),
                  pl.BlockSpec((1, Cout), lambda i: (0, 0)),
                  pl.BlockSpec((1, Cout), lambda i: (0, 0))],
        out_specs=pl.BlockSpec((tm, Cout), lambda i: (i, 0)),
        compiler_params=pltpu.CompilerParams(
            dimension_semantics=("parallel",)),
    )(x2, wrow, brow)
    return out[:M].reshape(N, H, W, Cout)


# --------------------------- blur (separable 4-tap FIR, NHWC) -------------------------

def _blur_kernel(xp_ref, o_ref, *, k1d, Ho, Wo):
    x = xp_ref[...]                                  # (Hp, Wp, C), batch squeezed
    kt = len(k1d)
    tmp = k1d[0] * x[0:Ho, :, :]                     # vertical pass
    for i in range(1, kt):
        tmp = tmp + k1d[i] * x[i:i + Ho, :, :]
    out = k1d[0] * tmp[:, 0:Wo, :]                   # horizontal pass
    for j in range(1, kt):
        out = out + k1d[j] * tmp[:, j:j + Wo, :]
    o_ref[...] = out.astype(o_ref.dtype)


def blur_nhwc(x, k1d, pad):
    """upfirdn2d (up=down=1): spatial pad then separable depthwise FIR. NHWC."""
    assert np.allclose(k1d, k1d[::-1]), "blur kernel assumed symmetric (no flip applied)"
    N, H, W, C = x.shape
    p0, p1 = pad
    kt = len(k1d)
    Hp, Wp = H + p0 + p1, W + p0 + p1
    Ho, Wo = Hp - kt + 1, Wp - kt + 1
    xp = jnp.pad(x.astype(jnp.float32), ((0, 0), (p0, p1), (p0, p1), (0, 0)))
    k1d_list = [float(v) for v in k1d]               # normalized 1D taps
    return pl.pallas_call(
        functools.partial(_blur_kernel, k1d=k1d_list, Ho=Ho, Wo=Wo),
        out_shape=jax.ShapeDtypeStruct((N, Ho, Wo, C), jnp.float32),
        grid=(N,),
        in_specs=[pl.BlockSpec((None, Hp, Wp, C), lambda n: (n, 0, 0, 0))],
        out_specs=pl.BlockSpec((None, Ho, Wo, C), lambda n: (n, 0, 0, 0)),
        compiler_params=pltpu.CompilerParams(
            dimension_semantics=("parallel",)),
    )(xp)


# ------------------------------ minibatch stddev ------------------------------------

def _stddev_kernel(x_ref, o_ref):
    G = x_ref.shape[0]
    mean = x_ref[0]
    for g in range(1, G):
        mean = mean + x_ref[g]
    mean = mean * (1.0 / G)
    var = (x_ref[0] - mean) ** 2
    for g in range(1, G):
        d = x_ref[g] - mean
        var = var + d * d
    var = var * (1.0 / G)                            # unbiased=False
    sd = jnp.sqrt(var + 1e-8)
    o_ref[...] = jnp.mean(sd, axis=-1, keepdims=True)


def minibatch_stddev(out_nhwc, stddev_group=4, stddev_feat=1):
    assert stddev_feat == 1
    B, H, W, C = out_nhwc.shape
    group = min(B, stddev_group)
    assert B % group == 0, "batch must be divisible by stddev group (as in reference)"
    M = B // group
    x = out_nhwc.reshape(group, M, H * W * C).astype(jnp.float32)
    sd = pl.pallas_call(
        _stddev_kernel,
        out_shape=jax.ShapeDtypeStruct((M, 1), jnp.float32),
        in_specs=[VMEM_SPEC],
        out_specs=VMEM_SPEC,
    )(x)
    sd_map = jnp.tile(sd.reshape(M, 1, 1, 1), (group, H, W, 1))    # (B,H,W,1)
    return jnp.concatenate([out_nhwc, sd_map], axis=-1)


# ----------------------------------- JAX glue ----------------------------------------

def im2col_nhwc(x, k, stride, padding):
    """x:(N,H,W,C) -> (N*Ho*Wo, k*k*C), row-major over (n,ho,wo); (kh,kw) outer, C inner."""
    N, H, W, C = x.shape
    xp = jnp.pad(x, ((0, 0), (padding, padding), (padding, padding), (0, 0)))
    Ho = (H + 2 * padding - k) // stride + 1
    Wo = (W + 2 * padding - k) // stride + 1
    cols = []
    for kh in range(k):
        for kw in range(k):
            cols.append(xp[:, kh:kh + (Ho - 1) * stride + 1:stride,
                              kw:kw + (Wo - 1) * stride + 1:stride, :])
    patches = jnp.concatenate(cols, axis=-1) if k > 1 else cols[0]
    return patches.reshape(N * Ho * Wo, k * k * C), N, Ho, Wo


def apply_conv_layer(layer, x, blur_k1d, residual=None):
    if layer['blur_pad'] is not None:
        x = blur_nhwc(x, blur_k1d, layer['blur_pad'])
    w = layer['w']                                   # (Cout, Cin, k, k)  PyTorch layout
    Cout, Cin, k, _ = w.shape
    wmat = (w * layer['scale']).transpose(2, 3, 1, 0).reshape(k * k * Cin, Cout)
    b = layer['bias'] if layer['bias'] is not None else jnp.zeros((Cout,), jnp.float32)
    # build im2col patches in bf16 (halves HBM traffic of the 9x-expanded operand)
    # TODO(synk): fully fuse im2col into the matmul grid (tap axis) to avoid HBM expansion.
    patches, N, Ho, Wo = im2col_nhwc(x.astype(jnp.bfloat16), k,
                                     layer['stride'], layer['padding'])
    res2d = residual.reshape(N * Ho * Wo, Cout) if residual is not None else None
    out = matmul_bias_act(patches, wmat, b, act=layer['activate'], residual=res2d)
    return out.reshape(N, Ho, Wo, Cout)              # already NHWC — no transpose


def apply_equal_linear(p, x, act):
    wmat = (p['w'] * p['scale']).T
    b = p['b'] * p['lr_mul']
    return matmul_bias_act(x, wmat, b, act=act)


# ----------------------------------- parameters --------------------------------------

def conv_layer_params(key, in_ch, out_ch, k, downsample=False, bias=True, activate=True):
    if downsample:
        factor = 2
        p = 4 - factor + (k - 1)                     # blur kernel length 4
        blur_pad = ((p + 1) // 2, p // 2)
        stride, padding = 2, 0
    else:
        blur_pad = None
        stride, padding = 1, k // 2
    w = jax.random.normal(key, (out_ch, in_ch, k, k), dtype=jnp.float32)
    # EqualConv2d bias (no act) and FusedLeakyReLU bias (act) are both zero-init
    # pre-activation per-channel biases -> single `bias` entry.
    return dict(
        w=w,
        scale=1.0 / math.sqrt(in_ch * k * k),
        stride=stride, padding=padding, blur_pad=blur_pad,
        activate=activate,
        bias=jnp.zeros((out_ch,), jnp.float32) if bias else None,
    )


def equal_linear_params(key, in_dim, out_dim, lr_mul=1.0, bias_init=0.0):
    w = jax.random.normal(key, (out_dim, in_dim), dtype=jnp.float32) / lr_mul
    return dict(
        w=w,
        b=jnp.full((out_dim,), bias_init, jnp.float32),
        scale=(1.0 / math.sqrt(in_dim)) * lr_mul,
        lr_mul=lr_mul,
    )


def build_discriminator_params(key, size, channel_multiplier=2, narrow=1.0):
    channels = {
        4: int(512 * narrow), 8: int(512 * narrow), 16: int(512 * narrow),
        32: int(512 * narrow), 64: int(256 * channel_multiplier * narrow),
        128: int(128 * channel_multiplier * narrow),
        256: int(64 * channel_multiplier * narrow),
        512: int(32 * channel_multiplier * narrow),
        1024: int(16 * channel_multiplier * narrow),
    }
    keys = iter(jax.random.split(key, 128))
    k1d = np.array([1.0, 3.0, 3.0, 1.0], dtype=np.float32)
    k1d = k1d / k1d.sum()                            # separable => outer(k,k)/sum == normalized 2D
    params = {'blur_k1d': k1d, 'channels4': channels[4]}
    params['conv0'] = conv_layer_params(next(keys), 1, channels[size], 1)
    log_size = int(math.log2(size))
    in_ch = channels[size]
    resblocks = []
    for i in range(log_size, 2, -1):
        out_ch = channels[2 ** (i - 1)]
        resblocks.append(dict(
            conv1=conv_layer_params(next(keys), in_ch, in_ch, 3),
            conv2=conv_layer_params(next(keys), in_ch, out_ch, 3, downsample=True),
            skip=conv_layer_params(next(keys), in_ch, out_ch, 1, downsample=True,
                                   activate=False, bias=False),
        ))
        in_ch = out_ch
    params['resblocks'] = resblocks
    params['final_conv'] = conv_layer_params(next(keys), in_ch + 1, channels[4], 3)
    params['lin1'] = equal_linear_params(next(keys), channels[4] * 4 * 4, channels[4])
    params['lin2'] = equal_linear_params(next(keys), channels[4], 1)
    return params


# ------------------------------------- forward ---------------------------------------

def discriminator_forward(params, x_nchw):
    bk = params['blur_k1d']
    x = jnp.transpose(x_nchw, (0, 2, 3, 1))          # NCHW -> NHWC, once at the top
    c0 = params['conv0']
    out = conv0_1x1(x, c0['w'], c0['scale'], c0['bias'])
    for rb in params['resblocks']:
        y = apply_conv_layer(rb['conv1'], out, bk)
        s = apply_conv_layer(rb['skip'], out, bk)                  # no act, no bias
        out = apply_conv_layer(rb['conv2'], y, bk, residual=s)     # (conv2+skip)/sqrt2 fused
    out = minibatch_stddev(out, stddev_group=4, stddev_feat=1)
    out = apply_conv_layer(params['final_conv'], out, bk)
    B = out.shape[0]
    out = jnp.transpose(out, (0, 3, 1, 2)).reshape(B, -1)          # PyTorch NCHW flatten order
    out = apply_equal_linear(params['lin1'], out, act=True)        # fused_lrelu
    out = apply_equal_linear(params['lin2'], out, act=False)
    return out


# --------------------------------------- main ----------------------------------------

if __name__ == "__main__":
    key = jax.random.PRNGKey(0)
    pkey, xkey = jax.random.split(key)

    size = 16                        # discriminator input resolution
    batch = 2
    # narrow=1/16 -> channels[4..32] = 32 (small, same topology as narrow=1)
    params = build_discriminator_params(pkey, size=size,
                                        channel_multiplier=2, narrow=1.0 / 16.0)
    x = jax.random.normal(xkey, (batch, 1, size, size), dtype=jnp.float32)

    out = discriminator_forward(params, x)
    out = jax.block_until_ready(out)

    assert out.shape == (batch, 1), out.shape
    assert bool(jnp.all(jnp.isfinite(out)))
    print("KERNEL_OK")
</pallas_src>

<mosaic_0001>
module attributes {stable_mosaic.version = 11 : i64} {
  func.func @_conv0_kernel(%arg0: i32, %arg1: memref<512x1xf32, #tpu.memory_space<vmem>>, %arg2: memref<1x32xf32, #tpu.memory_space<vmem>>, %arg3: memref<1x32xf32, #tpu.memory_space<vmem>>, %arg4: memref<512x32xf32, #tpu.memory_space<vmem>>) attributes {dimension_semantics = [#tpu.dimension_semantics<parallel>], iteration_bounds = array<i64: 1>, scalar_prefetch = 0 : i64, scratch_operands = 0 : i64, tpu.core_type = #tpu.core_type<tc>, window_params = [{transform_indices = @transform_0, window_bounds = array<i64: 512, 1>}, {pipeline_mode = #tpu.pipeline_mode<synchronous>, transform_indices = @transform_1, window_bounds = array<i64: 1, 32>}, {pipeline_mode = #tpu.pipeline_mode<synchronous>, transform_indices = @transform_2, window_bounds = array<i64: 1, 32>}, {transform_indices = @transform_3, window_bounds = array<i64: 512, 32>}]} {
    %c0 = arith.constant 0 : index
    %c0_0 = arith.constant 0 : index
    %0 = vector.load %arg1[%c0, %c0_0] : memref<512x1xf32, #tpu.memory_space<vmem>>, vector<512x1xf32>
    %c0_1 = arith.constant 0 : index
    %c0_2 = arith.constant 0 : index
    %1 = vector.load %arg2[%c0_1, %c0_2] : memref<1x32xf32, #tpu.memory_space<vmem>>, vector<1x32xf32>
    %2 = vector.broadcast %0 : vector<512x1xf32> to vector<512x32xf32>
    %3 = vector.broadcast %1 : vector<1x32xf32> to vector<512x32xf32>
    %4 = arith.mulf %2, %3 : vector<512x32xf32>
    %c0_3 = arith.constant 0 : index
    %c0_4 = arith.constant 0 : index
    %5 = vector.load %arg3[%c0_3, %c0_4] : memref<1x32xf32, #tpu.memory_space<vmem>>, vector<1x32xf32>
    %6 = vector.broadcast %5 : vector<1x32xf32> to vector<512x32xf32>
    %7 = arith.addf %4, %6 : vector<512x32xf32>
    %cst = arith.constant 0.000000e+00 : f32
    %8 = vector.broadcast %cst : f32 to vector<512x32xf32>
    %9 = arith.cmpf oge, %7, %8 : vector<512x32xf32>
    %cst_5 = arith.constant 2.000000e-01 : f32
    %10 = vector.broadcast %cst_5 : f32 to vector<512x32xf32>
    %11 = arith.mulf %10, %7 : vector<512x32xf32>
    %12 = arith.select %9, %7, %11 : vector<512x32xi1>, vector<512x32xf32>
    %cst_6 = arith.constant 1.41421354 : f32
    %13 = vector.broadcast %cst_6 : f32 to vector<512x32xf32>
    %14 = arith.mulf %12, %13 : vector<512x32xf32>
    %c0_7 = arith.constant 0 : index
    %c0_8 = arith.constant 0 : index
    %15 = vector.load %arg4[%c0_7, %c0_8] : memref<512x32xf32, #tpu.memory_space<vmem>>, vector<512x32xf32>
    tpu.vector_store %arg4[%c0_7, %c0_8], %14 {strides = array<i32>} : memref<512x32xf32, #tpu.memory_space<vmem>>, vector<512x32xf32>,
    return
  }
  func.func @transform_0(%arg0: i32) -> (i32, i32) {
    %c0_i32 = arith.constant 0 : i32
    %c0_i32_0 = arith.constant 0 : i32
    return %arg0, %c0_i32 : i32, i32
  }
  func.func @transform_1(%arg0: i32) -> (i32, i32) {
    %c0_i32 = arith.constant 0 : i32
    %c0_i32_0 = arith.constant 0 : i32
    %c0_i32_1 = arith.constant 0 : i32
    return %c0_i32, %c0_i32_0 : i32, i32
  }
  func.func @transform_2(%arg0: i32) -> (i32, i32) {
    %c0_i32 = arith.constant 0 : i32
    %c0_i32_0 = arith.constant 0 : i32
    %c0_i32_1 = arith.constant 0 : i32
    return %c0_i32, %c0_i32_0 : i32, i32
  }
  func.func @transform_3(%arg0: i32) -> (i32, i32) {
    %c0_i32 = arith.constant 0 : i32
    %c0_i32_0 = arith.constant 0 : i32
    return %arg0, %c0_i32 : i32, i32
  }
}

</mosaic_0001>

<llo_original>
// kernel: tpu_custom_call.1
$region0: #{tpu_custom_call.1}
  #allocation0 [shape = 'u32[]', space=smem, size = 0x4, offset = 0x4, fixed_abs, tag = 'smem constant byte address 0x4 - core index']
  #allocation1 [shape = 'u32[144,128]{1,0:T(1,128)}', space=vmem, size = 0x12000, scoped, tag = 'internal scratch']
  %s0 = inlined_call_operand.vmem [shape: f32[512,1], index: 0, kind: input, shape index: {}]
  %s1 = inlined_call_operand.vmem [shape: f32[1,32], index: 1, kind: input, shape index: {}]
  %s2 = inlined_call_operand.vmem [shape: f32[1,32], index: 2, kind: input, shape index: {}]
  %s3 = inlined_call_operand.vmem [shape: f32[512,32], index: 3, kind: output, shape index: {}]
  %s4 = sld [smem:[#allocation0]]
  $region22: #{tpu_custom_call.1} parent=0
    _
  %s6 = ssub.s32 1, %s4
  %s7 = scalar_select 0, %s6, %s4
  // Predicated region
  $region2: #{tpu_custom_call.1} parent=0 // pred_check
    _
  $region3: #{tpu_custom_call.1} parent=0 // pred_check_branch
    %9 = sbr.rel (0) target = $region5
  $region4: #{tpu_custom_call.1} parent=0 // pred_region
    _
  $region5: #{tpu_custom_call.1} parent=0 // pred_fallthru
    _
  // Predicated region
  $region6: #{tpu_custom_call.1} parent=0 // pred_check
    _
  $region7: #{tpu_custom_call.1} parent=0 // pred_check_branch
    %11 = sbr.rel (0) target = $region9
  $region8: #{tpu_custom_call.1} parent=0 // pred_region
    _
  $region9: #{tpu_custom_call.1} parent=0 // pred_fallthru
    _
  // Predicated region
  $region10: #{tpu_custom_call.1} parent=0 // pred_check
    _
  $region11: #{tpu_custom_call.1} parent=0 // pred_check_branch
    %13 = sbr.rel (0) target = $region13
  $region12: #{tpu_custom_call.1} parent=0 // pred_region
    _
  $region13: #{tpu_custom_call.1} parent=0 // pred_fallthru
    _
  %v14 = vld [vmem:[%s0] sm:$0xff]
  %v15 = vld [vmem:[%s0 + $0x8] sm:$0xff]
  %v16 = vld [vmem:[%s0 + $0x10] sm:$0xff]
  %v17 = vld [vmem:[%s0 + $0x18] sm:$0xff]
  %v18 = vld [vmem:[%s0 + $0x20] sm:$0xff]
  %v19 = vld [vmem:[%s0 + $0x28] sm:$0xff]
  %v20 = vld [vmem:[%s0 + $0x30] sm:$0xff]
  %v21 = vld [vmem:[%s0 + $0x38] sm:$0xff]
  %v22 = vld [vmem:[%s0 + $0x40] sm:$0xff]
  %v23 = vld [vmem:[%s0 + $0x48] sm:$0xff]
  %v24 = vld [vmem:[%s0 + $0x50] sm:$0xff]
  %v25 = vld [vmem:[%s0 + $0x58] sm:$0xff]
  %v26 = vld [vmem:[%s0 + $0x60] sm:$0xff]
  %v27 = vld [vmem:[%s0 + $0x68] sm:$0xff]
  %v28 = vld [vmem:[%s0 + $0x70] sm:$0xff]
  %v29 = vld [vmem:[%s0 + $0x78] sm:$0xff]
  %v30 = vld [vmem:[%s0 + $0x80] sm:$0xff]
  %v31 = vld [vmem:[%s0 + $0x88] sm:$0xff]
  %v32 = vld [vmem:[%s0 + $0x90] sm:$0xff]
  %v33 = vld [vmem:[%s0 + $0x98] sm:$0xff]
  %v34 = vld [vmem:[%s0 + $0xa0] sm:$0xff]
  %v35 = vld [vmem:[%s0 + $0xa8] sm:$0xff]
  %v36 = vld [vmem:[%s0 + $0xb0] sm:$0xff]
  %v37 = vld [vmem:[%s0 + $0xb8] sm:$0xff]
  %v38 = vld [vmem:[%s0 + $0xc0] sm:$0xff]
  %v39 = vld [vmem:[%s0 + $0xc8] sm:$0xff]
  %v40 = vld [vmem:[%s0 + $0xd0] sm:$0xff]
  %v41 = vld [vmem:[%s0 + $0xd8] sm:$0xff]
  %v42 = vld [vmem:[%s0 + $0xe0] sm:$0xff]
  %v43 = vld [vmem:[%s0 + $0xe8] sm:$0xff]
  %v44 = vld [vmem:[%s0 + $0xf0] sm:$0xff]
  %v45 = vld [vmem:[%s0 + $0xf8] sm:$0xff]
  %v46 = vld [vmem:[%s0 + $0x100] sm:$0xff]
  %v47 = vld [vmem:[%s0 + $0x108] sm:$0xff]
  %v48 = vld [vmem:[%s0 + $0x110] sm:$0xff]
  %v49 = vld [vmem:[%s0 + $0x118] sm:$0xff]
  %v50 = vld [vmem:[%s0 + $0x120] sm:$0xff]
  %v51 = vld [vmem:[%s0 + $0x128] sm:$0xff]
  %v52 = vld [vmem:[%s0 + $0x130] sm:$0xff]
  %v53 = vld [vmem:[%s0 + $0x138] sm:$0xff]
  %v54 = vld [vmem:[%s0 + $0x140] sm:$0xff]
  %v55 = vld [vmem:[%s0 + $0x148] sm:$0xff]
  %v56 = vld [vmem:[%s0 + $0x150] sm:$0xff]
  %v57 = vld [vmem:[%s0 + $0x158] sm:$0xff]
  %v58 = vld [vmem:[%s0 + $0x160] sm:$0xff]
  %v59 = vld [vmem:[%s0 + $0x168] sm:$0xff]
  %v60 = vld [vmem:[%s0 + $0x170] sm:$0xff]
  %v61 = vld [vmem:[%s0 + $0x178] sm:$0xff]
  %v62 = vld [vmem:[%s0 + $0x180] sm:$0xff]
  %v63 = vld [vmem:[%s0 + $0x188] sm:$0xff]
  %v64 = vld [vmem:[%s0 + $0x190] sm:$0xff]
  %v65 = vld [vmem:[%s0 + $0x198] sm:$0xff]
  %v66 = vld [vmem:[%s0 + $0x1a0] sm:$0xff]
  %v67 = vld [vmem:[%s0 + $0x1a8] sm:$0xff]
  %v68 = vld [vmem:[%s0 + $0x1b0] sm:$0xff]
  %v69 = vld [vmem:[%s0 + $0x1b8] sm:$0xff]
  %v70 = vld [vmem:[%s0 + $0x1c0] sm:$0xff]
  %v71 = vld [vmem:[%s0 + $0x1c8] sm:$0xff]
  %v72 = vld [vmem:[%s0 + $0x1d0] sm:$0xff]
  %v73 = vld [vmem:[%s0 + $0x1d8] sm:$0xff]
  %v74 = vld [vmem:[%s0 + $0x1e0] sm:$0xff]
  %v75 = vld [vmem:[%s0 + $0x1e8] sm:$0xff]
  %v76 = vld [vmem:[%s0 + $0x1f0] sm:$0xff]
  %v77 = vld [vmem:[%s0 + $0x1f8] sm:$0xff]
  %v78 = vld [vmem:[%s1] sm:$0x1]
  %80 = vset.pattern.permute.xlu0 0
  %81 = vperm.xlu0 %80, %v14
  %v82 = vpop.permute.xlu0 %81
  %85 = vset.pattern.permute.xlu0 0
  %86 = vperm.xlu0 %85, %v15
  %v87 = vpop.permute.xlu0 %86
  %90 = vset.pattern.permute.xlu0 0
  %91 = vperm.xlu0 %90, %v16
  %v92 = vpop.permute.xlu0 %91
  %95 = vset.pattern.permute.xlu0 0
  %96 = vperm.xlu0 %95, %v17
  %v97 = vpop.permute.xlu0 %96
  %100 = vset.pattern.permute.xlu0 0
  %101 = vperm.xlu0 %100, %v18
  %v102 = vpop.permute.xlu0 %101
  %105 = vset.pattern.permute.xlu0 0
  %106 = vperm.xlu0 %105, %v19
  %v107 = vpop.permute.xlu0 %106
  %110 = vset.pattern.permute.xlu0 0
  %111 = vperm.xlu0 %110, %v20
  %v112 = vpop.permute.xlu0 %111
  %115 = vset.pattern.permute.xlu0 0
  %116 = vperm.xlu0 %115, %v21
  %v117 = vpop.permute.xlu0 %116
  %120 = vset.pattern.permute.xlu0 0
  %121 = vperm.xlu0 %120, %v22
  %v122 = vpop.permute.xlu0 %121
  %125 = vset.pattern.permute.xlu0 0
  %126 = vperm.xlu0 %125, %v23
  %v127 = vpop.permute.xlu0 %126
  %130 = vset.pattern.permute.xlu0 0
  %131 = vperm.xlu0 %130, %v24
  %v132 = vpop.permute.xlu0 %131
  %135 = vset.pattern.permute.xlu0 0
  %136 = vperm.xlu0 %135, %v25
  %v137 = vpop.permute.xlu0 %136
  %140 = vset.pattern.permute.xlu0 0
  %141 = vperm.xlu0 %140, %v26
  %v142 = vpop.permute.xlu0 %141
  %145 = vset.pattern.permute.xlu0 0
  %146 = vperm.xlu0 %145, %v27
  %v147 = vpop.permute.xlu0 %146
  %150 = vset.pattern.permute.xlu0 0
  %151 = vperm.xlu0 %150, %v28
  %v152 = vpop.permute.xlu0 %151
  %155 = vset.pattern.permute.xlu0 0
  %156 = vperm.xlu0 %155, %v29
  %v157 = vpop.permute.xlu0 %156
  %160 = vset.pattern.permute.xlu0 0
  %161 = vperm.xlu0 %160, %v30
  %v162 = vpop.permute.xlu0 %161
  %165 = vset.pattern.permute.xlu0 0
  %166 = vperm.xlu0 %165, %v31
  %v167 = vpop.permute.xlu0 %166
  %170 = vset.pattern.permute.xlu0 0
  %171 = vperm.xlu0 %170, %v32
  %v172 = vpop.permute.xlu0 %171
  %175 = vset.pattern.permute.xlu0 0
  %176 = vperm.xlu0 %175, %v33
  %v177 = vpop.permute.xlu0 %176
  %180 = vset.pattern.permute.xlu0 0
  %181 = vperm.xlu0 %180, %v34
  %v182 = vpop.permute.xlu0 %181
  %185 = vset.pattern.permute.xlu0 0
  %186 = vperm.xlu0 %185, %v35
  %v187 = vpop.permute.xlu0 %186
  %190 = vset.pattern.permute.xlu0 0
  %191 = vperm.xlu0 %190, %v36
  %v192 = vpop.permute.xlu0 %191
  %195 = vset.pattern.permute.xlu0 0
  %196 = vperm.xlu0 %195, %v37
  %v197 = vpop.permute.xlu0 %196
  %200 = vset.pattern.permute.xlu0 0
  %201 = vperm.xlu0 %200, %v38
  %v202 = vpop.permute.xlu0 %201
  %205 = vset.pattern.permute.xlu0 0
  %206 = vperm.xlu0 %205, %v39
  %v207 = vpop.permute.xlu0 %206
  %210 = vset.pattern.permute.xlu0 0
  %211 = vperm.xlu0 %210, %v40
  %v212 = vpop.permute.xlu0 %211
  %215 = vset.pattern.permute.xlu0 0
  %216 = vperm.xlu0 %215, %v41
  %v217 = vpop.permute.xlu0 %216
  %220 = vset.pattern.permute.xlu0 0
  %221 = vperm.xlu0 %220, %v42
  %v222 = vpop.permute.xlu0 %221
  %225 = vset.pattern.permute.xlu0 0
  %226 = vperm.xlu0 %225, %v43
  %v227 = vpop.permute.xlu0 %226
  %230 = vset.pattern.permute.xlu0 0
  %231 = vperm.xlu0 %230, %v44
  %v232 = vpop.permute.xlu0 %231
  %235 = vset.pattern.permute.xlu0 0
  %236 = vperm.xlu0 %235, %v45
  %v237 = vpop.permute.xlu0 %236
  %240 = vset.pattern.permute.xlu0 0
  %241 = vperm.xlu0 %240, %v46
  %v242 = vpop.permute.xlu0 %241
  %245 = vset.pattern.permute.xlu0 0
  %246 = vperm.xlu0 %245, %v47
  %v247 = vpop.permute.xlu0 %246
  %250 = vset.pattern.permute.xlu0 0
  %251 = vperm.xlu0 %250, %v48
  %v252 = vpop.permute.xlu0 %251
  %255 = vset.pattern.permute.xlu0 0
  %256 = vperm.xlu0 %255, %v49
  %v257 = vpop.permute.xlu0 %256
  %260 = vset.pattern.permute.xlu0 0
  %261 = vperm.xlu0 %260, %v50
  %v262 = vpop.permute.xlu0 %261
  %265 = vset.pattern.permute.xlu0 0
  %266 = vperm.xlu0 %265, %v51
  %v267 = vpop.permute.xlu0 %266
  %270 = vset.pattern.permute.xlu0 0
  %271 = vperm.xlu0 %270, %v52
  %v272 = vpop.permute.xlu0 %271
  %275 = vset.pattern.permute.xlu0 0
  %276 = vperm.xlu0 %275, %v53
  %v277 = vpop.permute.xlu0 %276
  %280 = vset.pattern.permute.xlu0 0
  %281 = vperm.xlu0 %280, %v54
  %v282 = vpop.permute.xlu0 %281
  %285 = vset.pattern.permute.xlu0 0
  %286 = vperm.xlu0 %285, %v55
  %v287 = vpop.permute.xlu0 %286
  %290 = vset.pattern.permute.xlu0 0
  %291 = vperm.xlu0 %290, %v56
  %v292 = vpop.permute.xlu0 %291
  %295 = vset.pattern.permute.xlu0 0
  %296 = vperm.xlu0 %295, %v57
  %v297 = vpop.permute.xlu0 %296
  %300 = vset.pattern.permute.xlu0 0
  %301 = vperm.xlu0 %300, %v58
  %v302 = vpop.permute.xlu0 %301
  %305 = vset.pattern.permute.xlu0 0
  %306 = vperm.xlu0 %305, %v59
  %v307 = vpop.permute.xlu0 %306
  %310 = vset.pattern.permute.xlu0 0
  %311 = vperm.xlu0 %310, %v60
  %v312 = vpop.permute.xlu0 %311
  %315 = vset.pattern.permute.xlu0 0
  %316 = vperm.xlu0 %315, %v61
  %v317 = vpop.permute.xlu0 %316
  %320 = vset.pattern.permute.xlu0 0
  %321 = vperm.xlu0 %320, %v62
  %v322 = vpop.permute.xlu0 %321
  %325 = vset.pattern.permute.xlu0 0
  %326 = vperm.xlu0 %325, %v63
  %v327 = vpop.permute.xlu0 %326
  %330 = vset.pattern.permute.xlu0 0
  %331 = vperm.xlu0 %330, %v64
  %v332 = vpop.permute.xlu0 %331
  %335 = vset.pattern.permute.xlu0 0
  %336 = vperm.xlu0 %335, %v65
  %v337 = vpop.permute.xlu0 %336
  %340 = vset.pattern.permute.xlu0 0
  %341 = vperm.xlu0 %340, %v66
  %v342 = vpop.permute.xlu0 %341
  %345 = vset.pattern.permute.xlu0 0
  %346 = vperm.xlu0 %345, %v67
  %v347 = vpop.permute.xlu0 %346
  %350 = vset.pattern.permute.xlu0 0
  %351 = vperm.xlu0 %350, %v68
  %v352 = vpop.permute.xlu0 %351
  %355 = vset.pattern.permute.xlu0 0
  %356 = vperm.xlu0 %355, %v69
  %v357 = vpop.permute.xlu0 %356
  %360 = vset.pattern.permute.xlu0 0
  %361 = vperm.xlu0 %360, %v70
  %v362 = vpop.permute.xlu0 %361
  %365 = vset.pattern.permute.xlu0 0
  %366 = vperm.xlu0 %365, %v71
  %v367 = vpop.permute.xlu0 %366
  %370 = vset.pattern.permute.xlu0 0
  %371 = vperm.xlu0 %370, %v72
  %v372 = vpop.permute.xlu0 %371
  %375 = vset.pattern.permute.xlu0 0
  %376 = vperm.xlu0 %375, %v73
  %v377 = vpop.permute.xlu0 %376
  %380 = vset.pattern.permute.xlu0 0
  %381 = vperm.xlu0 %380, %v74
  %v382 = vpop.permute.xlu0 %381
  %385 = vset.pattern.permute.xlu0 0
  %386 = vperm.xlu0 %385, %v75
  %v387 = vpop.permute.xlu0 %386
  %390 = vset.pattern.permute.xlu0 0
  %391 = vperm.xlu0 %390, %v76
  %v392 = vpop.permute.xlu0 %391
  %395 = vset.pattern.permute.xlu0 0
  %396 = vperm.xlu0 %395, %v77
  %v397 = vpop.permute.xlu0 %396
  %v400 = vlaneseq
  %v401 = vshrl.u32 %v400, 7
  %v402 = vsub.s32 0, %v401
  %v403 = vrot.slane %v78, %v402
  %v405 = vmul.f32 %v82, %v403
  %v406 = vmul.f32 %v87, %v403
  %v407 = vmul.f32 %v92, %v403
  %v408 = vmul.f32 %v97, %v403
  %v409 = vmul.f32 %v102, %v403
  %v410 = vmul.f32 %v107, %v403
  %v411 = vmul.f32 %v112, %v403
  %v412 = vmul.f32 %v117, %v403
  %v413 = vmul.f32 %v122, %v403
  %v414 = vmul.f32 %v127, %v403
  %v415 = vmul.f32 %v132, %v403
  %v416 = vmul.f32 %v137, %v403
  %v417 = vmul.f32 %v142, %v403
  %v418 = vmul.f32 %v147, %v403
  %v419 = vmul.f32 %v152, %v403
  %v420 = vmul.f32 %v157, %v403
  %v421 = vmul.f32 %v162, %v403
  %v422 = vmul.f32 %v167, %v403
  %v423 = vmul.f32 %v172, %v403
  %v424 = vmul.f32 %v177, %v403
  %v425 = vmul.f32 %v182, %v403
  %v426 = vmul.f32 %v187, %v403
  %v427 = vmul.f32 %v192, %v403
  %v428 = vmul.f32 %v197, %v403
  %v429 = vmul.f32 %v202, %v403
  %v430 = vmul.f32 %v207, %v403
  %v431 = vmul.f32 %v212, %v403
  %v432 = vmul.f32 %v217, %v403
  %v433 = vmul.f32 %v222, %v403
  %v434 = vmul.f32 %v227, %v403
  %v435 = vmul.f32 %v232, %v403
  %v436 = vmul.f32 %v237, %v403
  %v437 = vmul.f32 %v242, %v403
  %v438 = vmul.f32 %v247, %v403
  %v439 = vmul.f32 %v252, %v403
  %v440 = vmul.f32 %v257, %v403
  %v441 = vmul.f32 %v262, %v403
  %v442 = vmul.f32 %v267, %v403
  %v443 = vmul.f32 %v272, %v403
  %v444 = vmul.f32 %v277, %v403
  %v445 = vmul.f32 %v282, %v403
  %v446 = vmul.f32 %v287, %v403
  %v447 = vmul.f32 %v292, %v403
  %v448 = vmul.f32 %v297, %v403
  %v449 = vmul.f32 %v302, %v403
  %v450 = vmul.f32 %v307, %v403
  %v451 = vmul.f32 %v312, %v403
  %v452 = vmul.f32 %v317, %v403
  %v453 = vmul.f32 %v322, %v403
  %v454 = vmul.f32 %v327, %v403
  %v455 = vmul.f32 %v332, %v403
  %v456 = vmul.f32 %v337, %v403
  %v457 = vmul.f32 %v342, %v403
  %v458 = vmul.f32 %v347, %v403
  %v459 = vmul.f32 %v352, %v403
  %v460 = vmul.f32 %v357, %v403
  %v461 = vmul.f32 %v362, %v403
  %v462 = vmul.f32 %v367, %v403
  %v463 = vmul.f32 %v372, %v403
  %v464 = vmul.f32 %v377, %v403
  %v465 = vmul.f32 %v382, %v403
  %v466 = vmul.f32 %v387, %v403
  %v467 = vmul.f32 %v392, %v403
  %v468 = vmul.f32 %v397, %v403
  %v469 = vld [vmem:[%s2] sm:$0x1]
  %v471 = vlaneseq
  %v472 = vshrl.u32 %v471, 7
  %v473 = vsub.s32 0, %v472
  %v474 = vrot.slane %v469, %v473
  %v476 = vadd.f32 %v405, %v474
  %v477 = vadd.f32 %v406, %v474
  %v478 = vadd.f32 %v407, %v474
  %v479 = vadd.f32 %v408, %v474
  %v480 = vadd.f32 %v409, %v474
  %v481 = vadd.f32 %v410, %v474
  %v482 = vadd.f32 %v411, %v474
  %v483 = vadd.f32 %v412, %v474
  %v484 = vadd.f32 %v413, %v474
  %v485 = vadd.f32 %v414, %v474
  %v486 = vadd.f32 %v415, %v474
  %v487 = vadd.f32 %v416, %v474
  %v488 = vadd.f32 %v417, %v474
  %v489 = vadd.f32 %v418, %v474
  %v490 = vadd.f32 %v419, %v474
  %v491 = vadd.f32 %v420, %v474
  %v492 = vadd.f32 %v421, %v474
  %v493 = vadd.f32 %v422, %v474
  %v494 = vadd.f32 %v423, %v474
  %v495 = vadd.f32 %v424, %v474
  %v496 = vadd.f32 %v425, %v474
  %v497 = vadd.f32 %v426, %v474
  %v498 = vadd.f32 %v427, %v474
  %v499 = vadd.f32 %v428, %v474
  %v500 = vadd.f32 %v429, %v474
  %v501 = vadd.f32 %v430, %v474
  %v502 = vadd.f32 %v431, %v474
  %v503 = vadd.f32 %v432, %v474
  %v504 = vadd.f32 %v433, %v474
  %v505 = vadd.f32 %v434, %v474
  %v506 = vadd.f32 %v435, %v474
  %v507 = vadd.f32 %v436, %v474
  %v508 = vadd.f32 %v437, %v474
  %v509 = vadd.f32 %v438, %v474
  %v510 = vadd.f32 %v439, %v474
  %v511 = vadd.f32 %v440, %v474
  %v512 = vadd.f32 %v441, %v474
  %v513 = vadd.f32 %v442, %v474
  %v514 = vadd.f32 %v443, %v474
  %v515 = vadd.f32 %v444, %v474
  %v516 = vadd.f32 %v445, %v474
  %v517 = vadd.f32 %v446, %v474
  %v518 = vadd.f32 %v447, %v474
  %v519 = vadd.f32 %v448, %v474
  %v520 = vadd.f32 %v449, %v474
  %v521 = vadd.f32 %v450, %v474
  %v522 = vadd.f32 %v451, %v474
  %v523 = vadd.f32 %v452, %v474
  %v524 = vadd.f32 %v453, %v474
  %v525 = vadd.f32 %v454, %v474
  %v526 = vadd.f32 %v455, %v474
  %v527 = vadd.f32 %v456, %v474
  %v528 = vadd.f32 %v457, %v474
  %v529 = vadd.f32 %v458, %v474
  %v530 = vadd.f32 %v459, %v474
  %v531 = vadd.f32 %v460, %v474
  %v532 = vadd.f32 %v461, %v474
  %v533 = vadd.f32 %v462, %v474
  %v534 = vadd.f32 %v463, %v474
  %v535 = vadd.f32 %v464, %v474
  %v536 = vadd.f32 %v465, %v474
  %v537 = vadd.f32 %v466, %v474
  %v538 = vadd.f32 %v467, %v474
  %v539 = vadd.f32 %v468, %v474
  %vm540 = vcmp.ge.f32.partialorder %v476, 0.0
  %vm541 = vcmp.ge.f32.partialorder %v477, 0.0
  %vm542 = vcmp.ge.f32.partialorder %v478, 0.0
  %vm543 = vcmp.ge.f32.partialorder %v479, 0.0
  %vm544 = vcmp.ge.f32.partialorder %v480, 0.0
  %vm545 = vcmp.ge.f32.partialorder %v481, 0.0
  %vm546 = vcmp.ge.f32.partialorder %v482, 0.0
  %vm547 = vcmp.ge.f32.partialorder %v483, 0.0
  %vm548 = vcmp.ge.f32.partialorder %v484, 0.0
  %vm549 = vcmp.ge.f32.partialorder %v485, 0.0
  %vm550 = vcmp.ge.f32.partialorder %v486, 0.0
  %vm551 = vcmp.ge.f32.partialorder %v487, 0.0
  %vm552 = vcmp.ge.f32.partialorder %v488, 0.0
  %vm553 = vcmp.ge.f32.partialorder %v489, 0.0
  %vm554 = vcmp.ge.f32.partialorder %v490, 0.0
  %vm555 = vcmp.ge.f32.partialorder %v491, 0.0
  %vm556 = vcmp.ge.f32.partialorder %v492, 0.0
  %vm557 = vcmp.ge.f32.partialorder %v493, 0.0
  %vm558 = vcmp.ge.f32.partialorder %v494, 0.0
  %vm559 = vcmp.ge.f32.partialorder %v495, 0.0
  %vm560 = vcmp.ge.f32.partialorder %v496, 0.0
  %vm561 = vcmp.ge.f32.partialorder %v497, 0.0
  %vm562 = vcmp.ge.f32.partialorder %v498, 0.0
  %vm563 = vcmp.ge.f32.partialorder %v499, 0.0
  %vm564 = vcmp.ge.f32.partialorder %v500, 0.0
  %vm565 = vcmp.ge.f32.partialorder %v501, 0.0
  %vm566 = vcmp.ge.f32.partialorder %v502, 0.0
  %vm567 = vcmp.ge.f32.partialorder %v503, 0.0
  %vm568 = vcmp.ge.f32.partialorder %v504, 0.0
  %vm569 = vcmp.ge.f32.partialorder %v505, 0.0
  %vm570 = vcmp.ge.f32.partialorder %v506, 0.0
  %vm571 = vcmp.ge.f32.partialorder %v507, 0.0
  %vm572 = vcmp.ge.f32.partialorder %v508, 0.0
  %vm573 = vcmp.ge.f32.partialorder %v509, 0.0
  %vm574 = vcmp.ge.f32.partialorder %v510, 0.0
  %vm575 = vcmp.ge.f32.partialorder %v511, 0.0
  %vm576 = vcmp.ge.f32.partialorder %v512, 0.0
  %vm577 = vcmp.ge.f32.partialorder %v513, 0.0
  %vm578 = vcmp.ge.f32.partialorder %v514, 0.0
  %vm579 = vcmp.ge.f32.partialorder %v515, 0.0
  %vm580 = vcmp.ge.f32.partialorder %v516, 0.0
  %vm581 = vcmp.ge.f32.partialorder %v517, 0.0
  %vm582 = vcmp.ge.f32.partialorder %v518, 0.0
  %vm583 = vcmp.ge.f32.partialorder %v519, 0.0
  %vm584 = vcmp.ge.f32.partialorder %v520, 0.0
  %vm585 = vcmp.ge.f32.partialorder %v521, 0.0
  %vm586 = vcmp.ge.f32.partialorder %v522, 0.0
  %vm587 = vcmp.ge.f32.partialorder %v523, 0.0
  %vm588 = vcmp.ge.f32.partialorder %v524, 0.0
  %vm589 = vcmp.ge.f32.partialorder %v525, 0.0
  %vm590 = vcmp.ge.f32.partialorder %v526, 0.0
  %vm591 = vcmp.ge.f32.partialorder %v527, 0.0
  %vm592 = vcmp.ge.f32.partialorder %v528, 0.0
  %vm593 = vcmp.ge.f32.partialorder %v529, 0.0
  %vm594 = vcmp.ge.f32.partialorder %v530, 0.0
  %vm595 = vcmp.ge.f32.partialorder %v531, 0.0
  %vm596 = vcmp.ge.f32.partialorder %v532, 0.0
  %vm597 = vcmp.ge.f32.partialorder %v533, 0.0
  %vm598 = vcmp.ge.f32.partialorder %v534, 0.0
  %vm599 = vcmp.ge.f32.partialorder %v535, 0.0
  %vm600 = vcmp.ge.f32.partialorder %v536, 0.0
  %vm601 = vcmp.ge.f32.partialorder %v537, 0.0
  %vm602 = vcmp.ge.f32.partialorder %v538, 0.0
  %vm603 = vcmp.ge.f32.partialorder %v539, 0.0
  %v604 = vmul.f32 %v476, 0.2
  %v605 = vmul.f32 %v477, 0.2
  %v606 = vmul.f32 %v478, 0.2
  %v607 = vmul.f32 %v479, 0.2
  %v608 = vmul.f32 %v480, 0.2
  %v609 = vmul.f32 %v481, 0.2
  %v610 = vmul.f32 %v482, 0.2
  %v611 = vmul.f32 %v483, 0.2
  %v612 = vmul.f32 %v484, 0.2
  %v613 = vmul.f32 %v485, 0.2
  %v614 = vmul.f32 %v486, 0.2
  %v615 = vmul.f32 %v487, 0.2
  %v616 = vmul.f32 %v488, 0.2
  %v617 = vmul.f32 %v489, 0.2
  %v618 = vmul.f32 %v490, 0.2
  %v619 = vmul.f32 %v491, 0.2
  %v620 = vmul.f32 %v492, 0.2
  %v621 = vmul.f32 %v493, 0.2
  %v622 = vmul.f32 %v494, 0.2
  %v623 = vmul.f32 %v495, 0.2
  %v624 = vmul.f32 %v496, 0.2
  %v625 = vmul.f32 %v497, 0.2
  %v626 = vmul.f32 %v498, 0.2
  %v627 = vmul.f32 %v499, 0.2
  %v628 = vmul.f32 %v500, 0.2
  %v629 = vmul.f32 %v501, 0.2
  %v630 = vmul.f32 %v502, 0.2
  %v631 = vmul.f32 %v503, 0.2
  %v632 = vmul.f32 %v504, 0.2
  %v633 = vmul.f32 %v505, 0.2
  %v634 = vmul.f32 %v506, 0.2
  %v635 = vmul.f32 %v507, 0.2
  %v636 = vmul.f32 %v508, 0.2
  %v637 = vmul.f32 %v509, 0.2
  %v638 = vmul.f32 %v510, 0.2
  %v639 = vmul.f32 %v511, 0.2
  %v640 = vmul.f32 %v512, 0.2
  %v641 = vmul.f32 %v513, 0.2
  %v642 = vmul.f32 %v514, 0.2
  %v643 = vmul.f32 %v515, 0.2
  %v644 = vmul.f32 %v516, 0.2
  %v645 = vmul.f32 %v517, 0.2
  %v646 = vmul.f32 %v518, 0.2
  %v647 = vmul.f32 %v519, 0.2
  %v648 = vmul.f32 %v520, 0.2
  %v649 = vmul.f32 %v521, 0.2
  %v650 = vmul.f32 %v522, 0.2
  %v651 = vmul.f32 %v523, 0.2
  %v652 = vmul.f32 %v524, 0.2
  %v653 = vmul.f32 %v525, 0.2
  %v654 = vmul.f32 %v526, 0.2
  %v655 = vmul.f32 %v527, 0.2
  %v656 = vmul.f32 %v528, 0.2
  %v657 = vmul.f32 %v529, 0.2
  %v658 = vmul.f32 %v530, 0.2
  %v659 = vmul.f32 %v531, 0.2
  %v660 = vmul.f32 %v532, 0.2
  %v661 = vmul.f32 %v533, 0.2
  %v662 = vmul.f32 %v534, 0.2
  %v663 = vmul.f32 %v535, 0.2
  %v664 = vmul.f32 %v536, 0.2
  %v665 = vmul.f32 %v537, 0.2
  %v666 = vmul.f32 %v538, 0.2
  %v667 = vmul.f32 %v539, 0.2
  %v668 = vsel %vm540, %v476, %v604
  %v669 = vsel %vm541, %v477, %v605
  %v670 = vsel %vm542, %v478, %v606
  %v671 = vsel %vm543, %v479, %v607
  %v672 = vsel %vm544, %v480, %v608
  %v673 = vsel %vm545, %v481, %v609
  %v674 = vsel %vm546, %v482, %v610
  %v675 = vsel %vm547, %v483, %v611
  %v676 = vsel %vm548, %v484, %v612
  %v677 = vsel %vm549, %v485, %v613
  %v678 = vsel %vm550, %v486, %v614
  %v679 = vsel %vm551, %v487, %v615
  %v680 = vsel %vm552, %v488, %v616
  %v681 = vsel %vm553, %v489, %v617
  %v682 = vsel %vm554, %v490, %v618
  %v683 = vsel %vm555, %v491, %v619
  %v684 = vsel %vm556, %v492, %v620
  %v685 = vsel %vm557, %v493, %v621
  %v686 = vsel %vm558, %v494, %v622
  %v687 = vsel %vm559, %v495, %v623
  %v688 = vsel %vm560, %v496, %v624
  %v689 = vsel %vm561, %v497, %v625
  %v690 = vsel %vm562, %v498, %v626
  %v691 = vsel %vm563, %v499, %v627
  %v692 = vsel %vm564, %v500, %v628
  %v693 = vsel %vm565, %v501, %v629
  %v694 = vsel %vm566, %v502, %v630
  %v695 = vsel %vm567, %v503, %v631
  %v696 = vsel %vm568, %v504, %v632
  %v697 = vsel %vm569, %v505, %v633
  %v698 = vsel %vm570, %v506, %v634
  %v699 = vsel %vm571, %v507, %v635
  %v700 = vsel %vm572, %v508, %v636
  %v701 = vsel %vm573, %v509, %v637
  %v702 = vsel %vm574, %v510, %v638
  %v703 = vsel %vm575, %v511, %v639
  %v704 = vsel %vm576, %v512, %v640
  %v705 = vsel %vm577, %v513, %v641
  %v706 = vsel %vm578, %v514, %v642
  %v707 = vsel %vm579, %v515, %v643
  %v708 = vsel %vm580, %v516, %v644
  %v709 = vsel %vm581, %v517, %v645
  %v710 = vsel %vm582, %v518, %v646
  %v711 = vsel %vm583, %v519, %v647
  %v712 = vsel %vm584, %v520, %v648
  %v713 = vsel %vm585, %v521, %v649
  %v714 = vsel %vm586, %v522, %v650
  %v715 = vsel %vm587, %v523, %v651
  %v716 = vsel %vm588, %v524, %v652
  %v717 = vsel %vm589, %v525, %v653
  %v718 = vsel %vm590, %v526, %v654
  %v719 = vsel %vm591, %v527, %v655
  %v720 = vsel %vm592, %v528, %v656
  %v721 = vsel %vm593, %v529, %v657
  %v722 = vsel %vm594, %v530, %v658
  %v723 = vsel %vm595, %v531, %v659
  %v724 = vsel %vm596, %v532, %v660
  %v725 = vsel %vm597, %v533, %v661
  %v726 = vsel %vm598, %v534, %v662
  %v727 = vsel %vm599, %v535, %v663
  %v728 = vsel %vm600, %v536, %v664
  %v729 = vsel %vm601, %v537, %v665
  %v730 = vsel %vm602, %v538, %v666
  %v731 = vsel %vm603, %v539, %v667
  %v732 = vmul.f32 %v668, 1.4142135
  %v733 = vmul.f32 %v669, 1.4142135
  %v734 = vmul.f32 %v670, 1.4142135
  %v735 = vmul.f32 %v671, 1.4142135
  %v736 = vmul.f32 %v672, 1.4142135
  %v737 = vmul.f32 %v673, 1.4142135
  %v738 = vmul.f32 %v674, 1.4142135
  %v739 = vmul.f32 %v675, 1.4142135
  %v740 = vmul.f32 %v676, 1.4142135
  %v741 = vmul.f32 %v677, 1.4142135
  %v742 = vmul.f32 %v678, 1.4142135
  %v743 = vmul.f32 %v679, 1.4142135
  %v744 = vmul.f32 %v680, 1.4142135
  %v745 = vmul.f32 %v681, 1.4142135
  %v746 = vmul.f32 %v682, 1.4142135
  %v747 = vmul.f32 %v683, 1.4142135
  %v748 = vmul.f32 %v684, 1.4142135
  %v749 = vmul.f32 %v685, 1.4142135
  %v750 = vmul.f32 %v686, 1.4142135
  %v751 = vmul.f32 %v687, 1.4142135
  %v752 = vmul.f32 %v688, 1.4142135
  %v753 = vmul.f32 %v689, 1.4142135
  %v754 = vmul.f32 %v690, 1.4142135
  %v755 = vmul.f32 %v691, 1.4142135
  %v756 = vmul.f32 %v692, 1.4142135
  %v757 = vmul.f32 %v693, 1.4142135
  %v758 = vmul.f32 %v694, 1.4142135
  %v759 = vmul.f32 %v695, 1.4142135
  %v760 = vmul.f32 %v696, 1.4142135
  %v761 = vmul.f32 %v697, 1.4142135
  %v762 = vmul.f32 %v698, 1.4142135
  %v763 = vmul.f32 %v699, 1.4142135
  %v764 = vmul.f32 %v700, 1.4142135
  %v765 = vmul.f32 %v701, 1.4142135
  %v766 = vmul.f32 %v702, 1.4142135
  %v767 = vmul.f32 %v703, 1.4142135
  %v768 = vmul.f32 %v704, 1.4142135
  %v769 = vmul.f32 %v705, 1.4142135
  %v770 = vmul.f32 %v706, 1.4142135
  %v771 = vmul.f32 %v707, 1.4142135
  %v772 = vmul.f32 %v708, 1.4142135
  %v773 = vmul.f32 %v709, 1.4142135
  %v774 = vmul.f32 %v710, 1.4142135
  %v775 = vmul.f32 %v711, 1.4142135
  %v776 = vmul.f32 %v712, 1.4142135
  %v777 = vmul.f32 %v713, 1.4142135
  %v778 = vmul.f32 %v714, 1.4142135
  %v779 = vmul.f32 %v715, 1.4142135
  %v780 = vmul.f32 %v716, 1.4142135
  %v781 = vmul.f32 %v717, 1.4142135
  %v782 = vmul.f32 %v718, 1.4142135
  %v783 = vmul.f32 %v719, 1.4142135
  %v784 = vmul.f32 %v720, 1.4142135
  %v785 = vmul.f32 %v721, 1.4142135
  %v786 = vmul.f32 %v722, 1.4142135
  %v787 = vmul.f32 %v723, 1.4142135
  %v788 = vmul.f32 %v724, 1.4142135
  %v789 = vmul.f32 %v725, 1.4142135
  %v790 = vmul.f32 %v726, 1.4142135
  %v791 = vmul.f32 %v727, 1.4142135
  %v792 = vmul.f32 %v728, 1.4142135
  %v793 = vmul.f32 %v729, 1.4142135
  %v794 = vmul.f32 %v730, 1.4142135
  %v795 = vmul.f32 %v731, 1.4142135
  %vm796 = vcmask 261120
  %797 = vst.msk [vmem:[%s3] sm:$0xff] %vm796, %v732
  %798 = vst.msk [vmem:[%s3 + $0x8] sm:$0xff] %vm796, %v733
  %799 = vst.msk [vmem:[%s3 + $0x10] sm:$0xff] %vm796, %v734
  %800 = vst.msk [vmem:[%s3 + $0x18] sm:$0xff] %vm796, %v735
  %801 = vst.msk [vmem:[%s3 + $0x20] sm:$0xff] %vm796, %v736
  %802 = vst.msk [vmem:[%s3 + $0x28] sm:$0xff] %vm796, %v737
  %803 = vst.msk [vmem:[%s3 + $0x30] sm:$0xff] %vm796, %v738
  %804 = vst.msk [vmem:[%s3 + $0x38] sm:$0xff] %vm796, %v739
  %805 = vst.msk [vmem:[%s3 + $0x40] sm:$0xff] %vm796, %v740
  %806 = vst.msk [vmem:[%s3 + $0x48] sm:$0xff] %vm796, %v741
  %807 = vst.msk [vmem:[%s3 + $0x50] sm:$0xff] %vm796, %v742
  %808 = vst.msk [vmem:[%s3 + $0x58] sm:$0xff] %vm796, %v743
  %809 = vst.msk [vmem:[%s3 + $0x60] sm:$0xff] %vm796, %v744
  %810 = vst.msk [vmem:[%s3 + $0x68] sm:$0xff] %vm796, %v745
  %811 = vst.msk [vmem:[%s3 + $0x70] sm:$0xff] %vm796, %v746
  %812 = vst.msk [vmem:[%s3 + $0x78] sm:$0xff] %vm796, %v747
  %813 = vst.msk [vmem:[%s3 + $0x80] sm:$0xff] %vm796, %v748
  %814 = vst.msk [vmem:[%s3 + $0x88] sm:$0xff] %vm796, %v749
  %815 = vst.msk [vmem:[%s3 + $0x90] sm:$0xff] %vm796, %v750
  %816 = vst.msk [vmem:[%s3 + $0x98] sm:$0xff] %vm796, %v751
  %817 = vst.msk [vmem:[%s3 + $0xa0] sm:$0xff] %vm796, %v752
  %818 = vst.msk [vmem:[%s3 + $0xa8] sm:$0xff] %vm796, %v753
  %819 = vst.msk [vmem:[%s3 + $0xb0] sm:$0xff] %vm796, %v754
  %820 = vst.msk [vmem:[%s3 + $0xb8] sm:$0xff] %vm796, %v755
  %821 = vst.msk [vmem:[%s3 + $0xc0] sm:$0xff] %vm796, %v756
  %822 = vst.msk [vmem:[%s3 + $0xc8] sm:$0xff] %vm796, %v757
  %823 = vst.msk [vmem:[%s3 + $0xd0] sm:$0xff] %vm796, %v758
  %824 = vst.msk [vmem:[%s3 + $0xd8] sm:$0xff] %vm796, %v759
  %825 = vst.msk [vmem:[%s3 + $0xe0] sm:$0xff] %vm796, %v760
  %826 = vst.msk [vmem:[%s3 + $0xe8] sm:$0xff] %vm796, %v761
  %827 = vst.msk [vmem:[%s3 + $0xf0] sm:$0xff] %vm796, %v762
  %828 = vst.msk [vmem:[%s3 + $0xf8] sm:$0xff] %vm796, %v763
  %829 = vst.msk [vmem:[%s3 + $0x100] sm:$0xff] %vm796, %v764
  %830 = vst.msk [vmem:[%s3 + $0x108] sm:$0xff] %vm796, %v765
  %831 = vst.msk [vmem:[%s3 + $0x110] sm:$0xff] %vm796, %v766
  %832 = vst.msk [vmem:[%s3 + $0x118] sm:$0xff] %vm796, %v767
  %833 = vst.msk [vmem:[%s3 + $0x120] sm:$0xff] %vm796, %v768
  %834 = vst.msk [vmem:[%s3 + $0x128] sm:$0xff] %vm796, %v769
  %835 = vst.msk [vmem:[%s3 + $0x130] sm:$0xff] %vm796, %v770
  %836 = vst.msk [vmem:[%s3 + $0x138] sm:$0xff] %vm796, %v771
  %837 = vst.msk [vmem:[%s3 + $0x140] sm:$0xff] %vm796, %v772
  %838 = vst.msk [vmem:[%s3 + $0x148] sm:$0xff] %vm796, %v773
  %839 = vst.msk [vmem:[%s3 + $0x150] sm:$0xff] %vm796, %v774
  %840 = vst.msk [vmem:[%s3 + $0x158] sm:$0xff] %vm796, %v775
  %841 = vst.msk [vmem:[%s3 + $0x160] sm:$0xff] %vm796, %v776
  %842 = vst.msk [vmem:[%s3 + $0x168] sm:$0xff] %vm796, %v777
  %843 = vst.msk [vmem:[%s3 + $0x170] sm:$0xff] %vm796, %v778
  %844 = vst.msk [vmem:[%s3 + $0x178] sm:$0xff] %vm796, %v779
  %845 = vst.msk [vmem:[%s3 + $0x180] sm:$0xff] %vm796, %v780
  %846 = vst.msk [vmem:[%s3 + $0x188] sm:$0xff] %vm796, %v781
  %847 = vst.msk [vmem:[%s3 + $0x190] sm:$0xff] %vm796, %v782
  %848 = vst.msk [vmem:[%s3 + $0x198] sm:$0xff] %vm796, %v783
  %849 = vst.msk [vmem:[%s3 + $0x1a0] sm:$0xff] %vm796, %v784
  %850 = vst.msk [vmem:[%s3 + $0x1a8] sm:$0xff] %vm796, %v785
  %851 = vst.msk [vmem:[%s3 + $0x1b0] sm:$0xff] %vm796, %v786
  %852 = vst.msk [vmem:[%s3 + $0x1b8] sm:$0xff] %vm796, %v787
  %853 = vst.msk [vmem:[%s3 + $0x1c0] sm:$0xff] %vm796, %v788
  %854 = vst.msk [vmem:[%s3 + $0x1c8] sm:$0xff] %vm796, %v789
  %855 = vst.msk [vmem:[%s3 + $0x1d0] sm:$0xff] %vm796, %v790
  %856 = vst.msk [vmem:[%s3 + $0x1d8] sm:$0xff] %vm796, %v791
  %857 = vst.msk [vmem:[%s3 + $0x1e0] sm:$0xff] %vm796, %v792
  %858 = vst.msk [vmem:[%s3 + $0x1e8] sm:$0xff] %vm796, %v793
  %859 = vst.msk [vmem:[%s3 + $0x1f0] sm:$0xff] %vm796, %v794
  %860 = vst.msk [vmem:[%s3 + $0x1f8] sm:$0xff] %vm796, %v795
  // Predicated region
  $region14: #{tpu_custom_call.1} parent=0 // pred_check
    _
  $region15: #{tpu_custom_call.1} parent=0 // pred_check_branch
    %862 = sbr.rel (0) target = $region17
  $region16: #{tpu_custom_call.1} parent=0 // pred_region
    _
  $region17: #{tpu_custom_call.1} parent=0 // pred_fallthru
    _
  // Predicated region
  $region18: #{tpu_custom_call.1} parent=0 // pred_check
    _
  $region19: #{tpu_custom_call.1} parent=0 // pred_check_branch
    %864 = sbr.rel (0) target = $region21
  $region20: #{tpu_custom_call.1} parent=0 // pred_region
    _
  $region21: #{tpu_custom_call.1} parent=0 // pred_fallthru
    _

</llo_original>
